<compile_context>
chip_gen: v6e
topology: v6e:2x2x1
jax: 0.10.0
libtpu: 0.0.40
codegen_flags: <defaults>
</compile_context>

<pallas_src>
import functools

import jax
import jax.numpy as jnp
from jax.experimental import pallas as pl
from jax.experimental.pallas import tpu as pltpu

LN_EPS = 1e-5  # torch.nn.LayerNorm default


def _round_up(x, m):
    return (x + m - 1) // m * m


def _cdiv(a, b):
    return -(-a // b)


def _layernorm(x, gamma, beta, width):
    """LayerNorm over the last axis using raw moments (both lane reductions
    issue back to back; rsqrt rides the otherwise-idle EUP slot).  `width` is
    the TRUE feature width -- padded columns of x are exactly zero so the sums
    are unaffected."""
    inv_w = 1.0 / float(width)
    s1 = jnp.sum(x, axis=-1, keepdims=True)
    s2 = jnp.sum(x * x, axis=-1, keepdims=True)
    mu = s1 * inv_w
    var = jnp.maximum(s2 * inv_w - mu * mu, 0.0)
    return (x - mu) * jax.lax.rsqrt(var + LN_EPS) * gamma + beta


def _critic_kernel(state_ref, action_ref, wslab_ref, vslab_ref, out_ref, *,
                   d_in, n_act, f1, f2, f1p, f2p, r_w2, r_wa):
    # Inputs arrive f32; cast to bf16 in-kernel (no wrapper pre-pass).
    x = state_ref[...].astype(jnp.bfloat16)       # (TILE_B, d_in)
    a = action_ref[...].astype(jnp.bfloat16)      # (TILE_B, n_act)

    # bf16 matmul weights: VMEM-resident slab, 16-row / 128-col aligned slices.
    w1 = wslab_ref[0:d_in, 0:f1p]                 # (d_in, f1p)
    w2 = wslab_ref[r_w2:r_w2 + f1p, 0:f2p]        # (f1p, f2p)  (pad rows are 0)
    wa = wslab_ref[r_wa:r_wa + n_act, 0:f2p]      # (n_act, f2p)

    # f32 bias / LayerNorm / q-head vectors (pad columns are 0).
    b1, g1, be1 = vslab_ref[0:1, 0:f1p], vslab_ref[1:2, 0:f1p], vslab_ref[2:3, 0:f1p]
    b2, g2, be2 = vslab_ref[3:4, 0:f2p], vslab_ref[4:5, 0:f2p], vslab_ref[5:6, 0:f2p]
    ba = vslab_ref[6:7, 0:f2p]
    wq = vslab_ref[7:8, 0:f2p]
    bq = vslab_ref[8:9, 0:1]                      # (1, 1)

    # fc1 -> LayerNorm -> relu   (bf16 operands, f32 MXU accumulation)
    sv = jnp.dot(x, w1, preferred_element_type=jnp.float32) + b1
    sv = _layernorm(sv, g1, be1, f1)
    sv = jnp.maximum(sv, 0.0)

    # fc2 -> LayerNorm
    sv = jnp.dot(sv.astype(jnp.bfloat16), w2,
                 preferred_element_type=jnp.float32) + b2
    sv = _layernorm(sv, g2, be2, f2)

    # action branch: relu(action_value(action))
    av = jnp.dot(a, wa, preferred_element_type=jnp.float32) + ba
    av = jnp.maximum(av, 0.0)

    # combine -> relu -> q head as VPU multiply + lane (XLU) reduction.
    sav = jnp.maximum(sv + av, 0.0)               # (TILE_B, f2p) f32, pad cols = 0
    q = jnp.sum(sav * wq, axis=-1) + bq           # (TILE_B,) + (1,1) -> (1, TILE_B)
    out_ref[0] = q.astype(out_ref.dtype)          # lane-dense store (batch on lanes)


def pack_params(params):
    """Pack parameters ONCE (at parameter-set/update time, not per forward).

    Returns a dict with:
      wslab (bf16): rows [w1 ; w2 (stored with f1p rows) ; wa], each segment
                    16-row aligned, width max(f1p, f2p) (128-column aligned).
      vslab (f32) : rows b1, g1, be1, b2, g2, be2, ba, wq, bq.
      dims        : static ints the kernel needs.
    Zero padding is load-bearing: padded entries must stay exactly zero so the
    LayerNorm statistics and matmuls remain exact.
    """
    d_in, f1 = params["w1"].shape
    f2 = params["w2"].shape[1]
    n_act = params["wa"].shape[0]
    f1p, f2p = _round_up(f1, 128), _round_up(f2, 128)
    width = max(f1p, f2p)

    r_w2 = _round_up(d_in, 16)          # bf16 packs 16 rows per sublane tile
    r_wa = r_w2 + f1p                   # w2 segment is stored with f1p rows
    rows = r_wa + _round_up(n_act, 16)

    wslab = jnp.zeros((rows, width), jnp.float32)
    wslab = wslab.at[0:d_in, :f1].set(params["w1"])
    wslab = wslab.at[r_w2:r_w2 + f1, :f2].set(params["w2"])
    wslab = wslab.at[r_wa:r_wa + n_act, :f2].set(params["wa"])
    wslab = wslab.astype(jnp.bfloat16)

    vslab = jnp.zeros((16, width), jnp.float32)
    vslab = vslab.at[0, :f1].set(params["b1"].reshape(f1))
    vslab = vslab.at[1, :f1].set(params["g1"].reshape(f1))
    vslab = vslab.at[2, :f1].set(params["be1"].reshape(f1))
    vslab = vslab.at[3, :f2].set(params["b2"].reshape(f2))
    vslab = vslab.at[4, :f2].set(params["g2"].reshape(f2))
    vslab = vslab.at[5, :f2].set(params["be2"].reshape(f2))
    vslab = vslab.at[6, :f2].set(params["ba"].reshape(f2))
    vslab = vslab.at[7, :f2].set(params["wq"].reshape(f2))
    vslab = vslab.at[8, 0].set(params["bq"].reshape(()))

    return {
        "wslab": wslab,
        "vslab": vslab,
        "dims": dict(d_in=d_in, n_act=n_act, f1=f1, f2=f2,
                     f1p=f1p, f2p=f2p, r_w2=r_w2, r_wa=r_wa),
    }


def critic_forward(state, action, packed, *, tile_b=None):
    """state: (B, input_dims) f32, action: (B, n_actions) f32 -> (B, 1) f32.
    `packed` is the output of pack_params (built once per parameter update)."""
    batch, d_in = state.shape
    n_act = action.shape[1]
    dims = packed["dims"]
    assert dims["d_in"] == d_in and dims["n_act"] == n_act
    wslab, vslab = packed["wslab"], packed["vslab"]

    if tile_b is None:
        if batch < 128:
            tile_b = _round_up(max(batch, 1), 8)   # one (near-)exact small tile
        elif batch <= 512:
            tile_b = _round_up(batch, 128)         # one big lane-dense tile
        else:
            # >= 2 balanced tiles so the "parallel" batch axis can shard across
            # v7x's two TensorCores; 1024-row tiles stay far below every
            # generation's scoped VMEM (incl. v5e's 16 MiB default).
            tile_b = min(1024, _round_up(_cdiv(batch, 2), 128))
    num_tiles = _cdiv(batch, tile_b)

    kernel = functools.partial(_critic_kernel, **dims)

    grid_spec = pltpu.PrefetchScalarGridSpec(
        num_scalar_prefetch=0,
        grid=(num_tiles,),
        in_specs=[
            pl.BlockSpec((tile_b, d_in), lambda i: (i, 0)),    # state tile (ragged tail OK)
            pl.BlockSpec((tile_b, n_act), lambda i: (i, 0)),   # action tile
            pl.BlockSpec(wslab.shape, lambda i: (0, 0)),       # resident bf16 weights
            pl.BlockSpec(vslab.shape, lambda i: (0, 0)),       # resident f32 vectors
        ],
        out_specs=pl.BlockSpec((1, 1, tile_b), lambda i: (i, 0, 0)),
    )

    out = pl.pallas_call(
        kernel,
        out_shape=jax.ShapeDtypeStruct((num_tiles, 1, tile_b), jnp.float32),
        grid_spec=grid_spec,
        compiler_params=pltpu.CompilerParams(
            dimension_semantics=("parallel",)),
    )(state, action, wslab, vslab)

    # Rows past `batch` in the ragged last tile hold garbage but every op in the
    # kernel is row-independent, so they are simply discarded here.
    return out.reshape(num_tiles * tile_b, 1)[:batch]


def init_params(key, input_dims, fc1_dims, fc2_dims, n_actions):
    """Deterministic init mirroring the PyTorch module's __init__ (weights stored
    transposed as (in, out))."""
    ks = jax.random.split(key, 8)

    def u(k, shape, bound):
        return jax.random.uniform(k, shape, jnp.float32, -bound, bound)

    f1 = 1.0 / jnp.sqrt(fc1_dims)      # torch uses weight.size()[0] = out_features
    f2 = 1.0 / jnp.sqrt(fc2_dims)
    f3 = 0.003
    fa = 1.0 / jnp.sqrt(n_actions)     # default nn.Linear bound (fan_in)

    return {
        "w1": u(ks[0], (input_dims, fc1_dims), f1),
        "b1": u(ks[1], (1, fc1_dims), f1),
        "g1": jnp.ones((1, fc1_dims), jnp.float32),
        "be1": jnp.zeros((1, fc1_dims), jnp.float32),
        "w2": u(ks[2], (fc1_dims, fc2_dims), f2),
        "b2": u(ks[3], (1, fc2_dims), f2),
        "g2": jnp.ones((1, fc2_dims), jnp.float32),
        "be2": jnp.zeros((1, fc2_dims), jnp.float32),
        "wa": u(ks[4], (n_actions, fc2_dims), fa),
        "ba": u(ks[5], (1, fc2_dims), fa),
        "wq": u(ks[6], (fc2_dims, 1), f3),
        "bq": u(ks[7], (1, 1), f3),
    }


def _layernorm_ref(x, gamma, beta):
    mu = jnp.mean(x, axis=-1, keepdims=True)
    var = jnp.mean((x - mu) * (x - mu), axis=-1, keepdims=True)
    return (x - mu) * jax.lax.rsqrt(var + LN_EPS) * gamma + beta


def reference_forward(state, action, p, matmul_dtype=jnp.float32):
    """Pure-JAX reference. matmul_dtype=bfloat16 mirrors the kernel's
    bf16-operand / f32-accumulate matmuls; float32 is the exact torch math."""
    c = lambda t: t.astype(matmul_dtype)
    sv = jnp.dot(c(state), c(p["w1"]), preferred_element_type=jnp.float32) + p["b1"]
    sv = _layernorm_ref(sv, p["g1"], p["be1"])
    sv = jnp.maximum(sv, 0.0)
    sv = jnp.dot(c(sv), c(p["w2"]), preferred_element_type=jnp.float32) + p["b2"]
    sv = _layernorm_ref(sv, p["g2"], p["be2"])
    av = jnp.maximum(
        jnp.dot(c(action), c(p["wa"]), preferred_element_type=jnp.float32) + p["ba"],
        0.0)
    sav = jnp.maximum(sv + av, 0.0)
    return sav @ p["wq"] + p["bq"]


if __name__ == "__main__":
    # Small shapes consistent with the module's forward.
    B, input_dims, fc1_dims, fc2_dims, n_actions = 8, 32, 128, 128, 8

    key = jax.random.PRNGKey(0)
    k_state, k_action, k_params = jax.random.split(key, 3)

    state = jax.random.normal(k_state, (B, input_dims), jnp.float32)
    action = jax.random.normal(k_action, (B, n_actions), jnp.float32)
    params = init_params(k_params, input_dims, fc1_dims, fc2_dims, n_actions)

    # Slabs are packed ONCE (parameter-update time), not on every forward.
    packed = pack_params(params)

    out = critic_forward(state, action, packed)
    out = jax.block_until_ready(out)
    assert out.shape == (B, 1)

    # Tight check vs a reference using the same bf16-operand / f32-accumulate matmuls.
    ref_bf16 = reference_forward(state, action, params, matmul_dtype=jnp.bfloat16)
    assert jnp.allclose(out, ref_bf16, atol=1e-4, rtol=1e-3), float(
        jnp.max(jnp.abs(out - ref_bf16)))

    # Loose check vs the pure-f32 (torch-exact) math: only bf16 operand rounding differs.
    ref_f32 = reference_forward(state, action, params, matmul_dtype=jnp.float32)
    assert float(jnp.max(jnp.abs(out - ref_f32))) < 5e-3

    print("KERNEL_OK")
</pallas_src>

<mosaic_0001>
module attributes {stable_mosaic.version = 11 : i64} {
  func.func @_critic_kernel(%arg0: i32, %arg1: memref<8x32xf32, #tpu.memory_space<vmem>>, %arg2: memref<8x8xf32, #tpu.memory_space<vmem>>, %arg3: memref<176x128xbf16, #tpu.memory_space<vmem>>, %arg4: memref<16x128xf32, #tpu.memory_space<vmem>>, %arg5: memref<1x1x8xf32, #tpu.memory_space<vmem>>) attributes {dimension_semantics = [#tpu.dimension_semantics<parallel>], iteration_bounds = array<i64: 1>, scalar_prefetch = 0 : i64, scratch_operands = 0 : i64, tpu.core_type = #tpu.core_type<tc>, window_params = [{transform_indices = @transform_0, window_bounds = array<i64: 8, 32>}, {transform_indices = @transform_1, window_bounds = array<i64: 8, 8>}, {pipeline_mode = #tpu.pipeline_mode<synchronous>, transform_indices = @transform_2, window_bounds = array<i64: 176, 128>}, {pipeline_mode = #tpu.pipeline_mode<synchronous>, transform_indices = @transform_3, window_bounds = array<i64: 16, 128>}, {transform_indices = @transform_4, window_bounds = array<i64: 1, 1, 8>}]} {
    %c0 = arith.constant 0 : index
    %c0_0 = arith.constant 0 : index
    %0 = vector.load %arg1[%c0, %c0_0] : memref<8x32xf32, #tpu.memory_space<vmem>>, vector<8x32xf32>
    %1 = arith.truncf %0 : vector<8x32xf32> to vector<8x32xbf16>
    %c0_1 = arith.constant 0 : index
    %c0_2 = arith.constant 0 : index
    %2 = vector.load %arg2[%c0_1, %c0_2] : memref<8x8xf32, #tpu.memory_space<vmem>>, vector<8x8xf32>
    %3 = arith.truncf %2 : vector<8x8xf32> to vector<8x8xbf16>
    %c0_3 = arith.constant 0 : index
    %c0_4 = arith.constant 0 : index
    %4 = vector.load %arg3[%c0_3, %c0_4] : memref<176x128xbf16, #tpu.memory_space<vmem>>, vector<32x128xbf16>
    %c32 = arith.constant 32 : index
    %c0_5 = arith.constant 0 : index
    %5 = vector.load %arg3[%c32, %c0_5] : memref<176x128xbf16, #tpu.memory_space<vmem>>, vector<128x128xbf16>
    %c160 = arith.constant 160 : index
    %c0_6 = arith.constant 0 : index
    %6 = vector.load %arg3[%c160, %c0_6] : memref<176x128xbf16, #tpu.memory_space<vmem>>, vector<8x128xbf16>
    %c0_7 = arith.constant 0 : index
    %c0_8 = arith.constant 0 : index
    %7 = vector.load %arg4[%c0_7, %c0_8] : memref<16x128xf32, #tpu.memory_space<vmem>>, vector<1x128xf32>
    %c1 = arith.constant 1 : index
    %c0_9 = arith.constant 0 : index
    %8 = vector.load %arg4[%c1, %c0_9] : memref<16x128xf32, #tpu.memory_space<vmem>>, vector<1x128xf32>
    %c2 = arith.constant 2 : index
    %c0_10 = arith.constant 0 : index
    %9 = vector.load %arg4[%c2, %c0_10] : memref<16x128xf32, #tpu.memory_space<vmem>>, vector<1x128xf32>
    %c3 = arith.constant 3 : index
    %c0_11 = arith.constant 0 : index
    %10 = vector.load %arg4[%c3, %c0_11] : memref<16x128xf32, #tpu.memory_space<vmem>>, vector<1x128xf32>
    %c4 = arith.constant 4 : index
    %c0_12 = arith.constant 0 : index
    %11 = vector.load %arg4[%c4, %c0_12] : memref<16x128xf32, #tpu.memory_space<vmem>>, vector<1x128xf32>
    %c5 = arith.constant 5 : index
    %c0_13 = arith.constant 0 : index
    %12 = vector.load %arg4[%c5, %c0_13] : memref<16x128xf32, #tpu.memory_space<vmem>>, vector<1x128xf32>
    %c6 = arith.constant 6 : index
    %c0_14 = arith.constant 0 : index
    %13 = vector.load %arg4[%c6, %c0_14] : memref<16x128xf32, #tpu.memory_space<vmem>>, vector<1x128xf32>
    %c7 = arith.constant 7 : index
    %c0_15 = arith.constant 0 : index
    %14 = vector.load %arg4[%c7, %c0_15] : memref<16x128xf32, #tpu.memory_space<vmem>>, vector<1x128xf32>
    %c8 = arith.constant 8 : index
    %c0_16 = arith.constant 0 : index
    %15 = vector.load %arg4[%c8, %c0_16] : memref<16x128xf32, #tpu.memory_space<vmem>>, vector<1x1xf32>
    %cst = arith.constant dense<0.000000e+00> : vector<8x128xf32>
    %16 = tpu.matmul %1, %4, %cst {dimension_numbers = #tpu.dot_dimension_numbers<[1], [0], [0], [1], [0, 0, 1, 1], [], []>} : vector<8x32xbf16>, vector<32x128xbf16>, vector<8x128xf32> -> vector<8x128xf32>
    %17 = vector.broadcast %7 : vector<1x128xf32> to vector<8x128xf32>
    %18 = arith.addf %16, %17 : vector<8x128xf32>
    %cst_17 = arith.constant dense<0.000000e+00> : vector<8xf32>
    %19 = vector.multi_reduction <add>, %18, %cst_17 [1] : vector<8x128xf32> to vector<8xf32>
    %20 = vector.shape_cast %19 : vector<8xf32> to vector<8x1xf32>
    %21 = arith.mulf %18, %18 : vector<8x128xf32>
    %cst_18 = arith.constant dense<0.000000e+00> : vector<8xf32>
    %22 = vector.multi_reduction <add>, %21, %cst_18 [1] : vector<8x128xf32> to vector<8xf32>
    %23 = vector.shape_cast %22 : vector<8xf32> to vector<8x1xf32>
    %cst_19 = arith.constant 7.812500e-03 : f32
    %24 = vector.broadcast %cst_19 : f32 to vector<8x1xf32>
    %25 = arith.mulf %20, %24 : vector<8x1xf32>
    %cst_20 = arith.constant 7.812500e-03 : f32
    %26 = vector.broadcast %cst_20 : f32 to vector<8x1xf32>
    %27 = arith.mulf %23, %26 : vector<8x1xf32>
    %28 = arith.mulf %25, %25 : vector<8x1xf32>
    %29 = arith.subf %27, %28 : vector<8x1xf32>
    %cst_21 = arith.constant 0.000000e+00 : f32
    %30 = vector.broadcast %cst_21 : f32 to vector<8x1xf32>
    %31 = arith.maximumf %29, %30 : vector<8x1xf32>
    %32 = vector.broadcast %25 : vector<8x1xf32> to vector<8x128xf32>
    %33 = arith.subf %18, %32 : vector<8x128xf32>
    %cst_22 = arith.constant 9.99999974E-6 : f32
    %34 = vector.broadcast %cst_22 : f32 to vector<8x1xf32>
    %35 = arith.addf %31, %34 : vector<8x1xf32>
    %36 = math.rsqrt %35 : vector<8x1xf32>
    %37 = vector.broadcast %36 : vector<8x1xf32> to vector<8x128xf32>
    %38 = arith.mulf %33, %37 : vector<8x128xf32>
    %39 = vector.broadcast %8 : vector<1x128xf32> to vector<8x128xf32>
    %40 = arith.mulf %38, %39 : vector<8x128xf32>
    %41 = vector.broadcast %9 : vector<1x128xf32> to vector<8x128xf32>
    %42 = arith.addf %40, %41 : vector<8x128xf32>
    %cst_23 = arith.constant 0.000000e+00 : f32
    %43 = vector.broadcast %cst_23 : f32 to vector<8x128xf32>
    %44 = arith.maximumf %42, %43 : vector<8x128xf32>
    %45 = arith.truncf %44 : vector<8x128xf32> to vector<8x128xbf16>
    %cst_24 = arith.constant dense<0.000000e+00> : vector<8x128xf32>
    %46 = tpu.matmul %45, %5, %cst_24 {dimension_numbers = #tpu.dot_dimension_numbers<[1], [0], [0], [1], [0, 0, 1, 1], [], []>} : vector<8x128xbf16>, vector<128x128xbf16>, vector<8x128xf32> -> vector<8x128xf32>
    %47 = vector.broadcast %10 : vector<1x128xf32> to vector<8x128xf32>
    %48 = arith.addf %46, %47 : vector<8x128xf32>
    %cst_25 = arith.constant dense<0.000000e+00> : vector<8xf32>
    %49 = vector.multi_reduction <add>, %48, %cst_25 [1] : vector<8x128xf32> to vector<8xf32>
    %50 = vector.shape_cast %49 : vector<8xf32> to vector<8x1xf32>
    %51 = arith.mulf %48, %48 : vector<8x128xf32>
    %cst_26 = arith.constant dense<0.000000e+00> : vector<8xf32>
    %52 = vector.multi_reduction <add>, %51, %cst_26 [1] : vector<8x128xf32> to vector<8xf32>
    %53 = vector.shape_cast %52 : vector<8xf32> to vector<8x1xf32>
    %cst_27 = arith.constant 7.812500e-03 : f32
    %54 = vector.broadcast %cst_27 : f32 to vector<8x1xf32>
    %55 = arith.mulf %50, %54 : vector<8x1xf32>
    %cst_28 = arith.constant 7.812500e-03 : f32
    %56 = vector.broadcast %cst_28 : f32 to vector<8x1xf32>
    %57 = arith.mulf %53, %56 : vector<8x1xf32>
    %58 = arith.mulf %55, %55 : vector<8x1xf32>
    %59 = arith.subf %57, %58 : vector<8x1xf32>
    %cst_29 = arith.constant 0.000000e+00 : f32
    %60 = vector.broadcast %cst_29 : f32 to vector<8x1xf32>
    %61 = arith.maximumf %59, %60 : vector<8x1xf32>
    %62 = vector.broadcast %55 : vector<8x1xf32> to vector<8x128xf32>
    %63 = arith.subf %48, %62 : vector<8x128xf32>
    %cst_30 = arith.constant 9.99999974E-6 : f32
    %64 = vector.broadcast %cst_30 : f32 to vector<8x1xf32>
    %65 = arith.addf %61, %64 : vector<8x1xf32>
    %66 = math.rsqrt %65 : vector<8x1xf32>
    %67 = vector.broadcast %66 : vector<8x1xf32> to vector<8x128xf32>
    %68 = arith.mulf %63, %67 : vector<8x128xf32>
    %69 = vector.broadcast %11 : vector<1x128xf32> to vector<8x128xf32>
    %70 = arith.mulf %68, %69 : vector<8x128xf32>
    %71 = vector.broadcast %12 : vector<1x128xf32> to vector<8x128xf32>
    %72 = arith.addf %70, %71 : vector<8x128xf32>
    %cst_31 = arith.constant dense<0.000000e+00> : vector<8x128xf32>
    %73 = tpu.matmul %3, %6, %cst_31 {dimension_numbers = #tpu.dot_dimension_numbers<[1], [0], [0], [1], [0, 0, 1, 1], [], []>} : vector<8x8xbf16>, vector<8x128xbf16>, vector<8x128xf32> -> vector<8x128xf32>
    %74 = vector.broadcast %13 : vector<1x128xf32> to vector<8x128xf32>
    %75 = arith.addf %73, %74 : vector<8x128xf32>
    %cst_32 = arith.constant 0.000000e+00 : f32
    %76 = vector.broadcast %cst_32 : f32 to vector<8x128xf32>
    %77 = arith.maximumf %75, %76 : vector<8x128xf32>
    %78 = arith.addf %72, %77 : vector<8x128xf32>
    %cst_33 = arith.constant 0.000000e+00 : f32
    %79 = vector.broadcast %cst_33 : f32 to vector<8x128xf32>
    %80 = arith.maximumf %78, %79 : vector<8x128xf32>
    %81 = vector.broadcast %14 : vector<1x128xf32> to vector<8x128xf32>
    %82 = arith.mulf %80, %81 : vector<8x128xf32>
    %cst_34 = arith.constant dense<0.000000e+00> : vector<8xf32>
    %83 = vector.multi_reduction <add>, %82, %cst_34 [1] : vector<8x128xf32> to vector<8xf32>
    %84 = vector.shape_cast %83 : vector<8xf32> to vector<1x8xf32>
    %85 = vector.broadcast %15 : vector<1x1xf32> to vector<1x8xf32>
    %86 = arith.addf %84, %85 : vector<1x8xf32>
    %c0_35 = arith.constant 0 : index
    %c0_36 = arith.constant 0 : index
    %c0_37 = arith.constant 0 : index
    %87 = vector.load %arg5[%c0_35, %c0_36, %c0_37] : memref<1x1x8xf32, #tpu.memory_space<vmem>>, vector<1x1x8xf32>
    %88 = vector.shape_cast %87 : vector<1x1x8xf32> to vector<1x8xf32>
    %89 = vector.shape_cast %86 : vector<1x8xf32> to vector<1x1x8xf32>
    tpu.vector_store %arg5[%c0_35, %c0_36, %c0_37], %89 {strides = array<i32>} : memref<1x1x8xf32, #tpu.memory_space<vmem>>, vector<1x1x8xf32>,
    return
  }
  func.func @transform_0(%arg0: i32) -> (i32, i32) {
    %c0_i32 = arith.constant 0 : i32
    %c0_i32_0 = arith.constant 0 : i32
    return %arg0, %c0_i32 : i32, i32
  }
  func.func @transform_1(%arg0: i32) -> (i32, i32) {
    %c0_i32 = arith.constant 0 : i32
    %c0_i32_0 = arith.constant 0 : i32
    return %arg0, %c0_i32 : i32, i32
  }
  func.func @transform_2(%arg0: i32) -> (i32, i32) {
    %c0_i32 = arith.constant 0 : i32
    %c0_i32_0 = arith.constant 0 : i32
    %c0_i32_1 = arith.constant 0 : i32
    return %c0_i32, %c0_i32_0 : i32, i32
  }
  func.func @transform_3(%arg0: i32) -> (i32, i32) {
    %c0_i32 = arith.constant 0 : i32
    %c0_i32_0 = arith.constant 0 : i32
    %c0_i32_1 = arith.constant 0 : i32
    return %c0_i32, %c0_i32_0 : i32, i32
  }
  func.func @transform_4(%arg0: i32) -> (i32, i32, i32) {
    %c0_i32 = arith.constant 0 : i32
    %c0_i32_0 = arith.constant 0 : i32
    %c0_i32_1 = arith.constant 0 : i32
    return %arg0, %c0_i32, %c0_i32_0 : i32, i32, i32
  }
}

</mosaic_0001>

<llo_original>
// kernel: tpu_custom_call.1
$region0: #{tpu_custom_call.1}
  #allocation0 [shape = 'u32[]', space=smem, size = 0x4, offset = 0x4, fixed_abs, tag = 'smem constant byte address 0x4 - core index']
  #allocation1 [shape = 'u32[144,128]{1,0:T(1,128)}', space=vmem, size = 0x12000, scoped, tag = 'internal scratch']
  %s0 = inlined_call_operand.hbm [shape: f32[8,32], index: 0, kind: input, shape index: {}]
  %s1 = inlined_call_operand.hbm [shape: f32[8,8], index: 1, kind: input, shape index: {}]
  %s2 = inlined_call_operand.hbm [shape: bf16[176,128], index: 2, kind: input, shape index: {}]
  %s3 = inlined_call_operand.hbm [shape: f32[16,128], index: 3, kind: input, shape index: {}]
  %s4 = inlined_call_operand.hbm [shape: f32[1,1,8], index: 4, kind: output, shape index: {}]
  %s5 = sld [smem:[#allocation0]]
  $region42: #{tpu_custom_call.1} parent=0
    _
  %s7 = ssub.s32 1, %s5
  %s8 = scalar_select 0, %s7, %s5
  $region1: #{tpu_custom_call.1} parent=0
    #allocation2 [shape = 'u8[4096]{0}', space=vmem, size = 0x1000, scoped, tag = 'input window, operand 0, single buffered']
    #allocation3 [shape = 's32[1]{0}', space=sflag, size = 0x4, scoped, tag = 'scoped memory for tpu_custom_call.1']
    #allocation4 [shape = 's32[1]{0}', space=sflag, size = 0x4, scoped, tag = 'scoped memory for tpu_custom_call.1']
    #allocation5 [shape = 'u8[4096]{0}', space=vmem, size = 0x1000, scoped, tag = 'input window, operand 1, single buffered']
    #allocation6 [shape = 's32[1]{0}', space=sflag, size = 0x4, scoped, tag = 'scoped memory for tpu_custom_call.1']
    #allocation7 [shape = 'u8[45056]{0}', space=vmem, size = 0xb000, scoped, tag = 'input window, operand 2, single buffered']
    #allocation8 [shape = 'u8[8192]{0}', space=vmem, size = 0x2000, scoped, tag = 'input window, operand 3, single buffered']
    #allocation9 [shape = 's32[1]{0}', space=sflag, size = 0x4, scoped, tag = 'scoped memory for tpu_custom_call.1']
    #allocation10 [shape = 'u8[512]{0}', space=vmem, size = 0x400, scoped, tag = 'output window, operand 0, single buffered']
    %9 = vsyncpa [#allocation3], 0
    %10 = vsyncpa [#allocation6], 0
    %11 = vsyncpa [#allocation9], 0
    %12 = vsyncpa [#allocation4], 0
    // Predicated region
    $region2: #{tpu_custom_call.1} parent=1 // pred_check
      _
    $region3: #{tpu_custom_call.1} parent=1 // pred_check_branch
      %14 = sbr.rel (0) target = $region5
    $region4: #{tpu_custom_call.1} parent=1 // pred_region
      %s16 = ssub.s32 128, 128
      %17 = vsyncadd [#allocation3], %s16
      %s19 = sshll.u32 [#allocation2], 4
      %s20 = int_to_ptr.vmem [resolvable:$true] %s19
      %22 = dma.hbm_to_vmem [thread:$0]  %s0, 128, %s20, [#allocation3]
    $region5: #{tpu_custom_call.1} parent=1 // pred_fallthru
      _
    // Predicated region
    $region6: #{tpu_custom_call.1} parent=1 // pred_check
      _
    $region7: #{tpu_custom_call.1} parent=1 // pred_check_branch
      %24 = sbr.rel (0) target = $region9
    $region8: #{tpu_custom_call.1} parent=1 // pred_region
      %s26 = ssub.s32 128, 128
      %27 = vsyncadd [#allocation6], %s26
      %s29 = sshll.u32 [#allocation5], 4
      %s30 = int_to_ptr.vmem [resolvable:$true] %s29
      %32 = dma.hbm_to_vmem [thread:$0]  %s1, 128, %s30, [#allocation6]
    $region9: #{tpu_custom_call.1} parent=1 // pred_fallthru
      _
    // Predicated region
    $region10: #{tpu_custom_call.1} parent=1 // pred_check
      _
    $region11: #{tpu_custom_call.1} parent=1 // pred_check_branch
      %34 = sbr.rel (0) target = $region13
    $region12: #{tpu_custom_call.1} parent=1 // pred_region
      %s36 = ssub.s32 1408, 1408
      %37 = vsyncadd [#allocation6], %s36
      %s38 = sshll.u32 [#allocation7], 4
      %s39 = int_to_ptr.vmem [resolvable:$true] %s38
      %44 = dma.hbm_to_vmem [thread:$0]  %s2, 1408, %s39, [#allocation6], 64, 64, 4
    $region13: #{tpu_custom_call.1} parent=1 // pred_fallthru
      _
    // Predicated region
    $region14: #{tpu_custom_call.1} parent=1 // pred_check
      _
    $region15: #{tpu_custom_call.1} parent=1 // pred_check_branch
      %46 = sbr.rel (0) target = $region17
    $region16: #{tpu_custom_call.1} parent=1 // pred_region
      %s48 = ssub.s32 256, 256
      %49 = vsyncadd [#allocation9], %s48
      %s50 = sshll.u32 [#allocation8], 4
      %s51 = int_to_ptr.vmem [resolvable:$true] %s50
      %56 = dma.hbm_to_vmem [thread:$0]  %s3, 256, %s51, [#allocation9], 128, 128, 8
    $region17: #{tpu_custom_call.1} parent=1 // pred_fallthru
      _
    // Predicated region
    $region18: #{tpu_custom_call.1} parent=1 // pred_check
      _
    $region19: #{tpu_custom_call.1} parent=1 // pred_check_branch
      %58 = sbr.rel (0) target = $region21
    $region20: #{tpu_custom_call.1} parent=1 // pred_region
      %59 = dma.done [#allocation3], 128
    $region21: #{tpu_custom_call.1} parent=1 // pred_fallthru
      _
    // Predicated region
    $region22: #{tpu_custom_call.1} parent=1 // pred_check
      _
    $region23: #{tpu_custom_call.1} parent=1 // pred_check_branch
      %61 = sbr.rel (0) target = $region25
    $region24: #{tpu_custom_call.1} parent=1 // pred_region
      %62 = dma.done [#allocation6], 128
    $region25: #{tpu_custom_call.1} parent=1 // pred_fallthru
      _
    // Predicated region
    $region26: #{tpu_custom_call.1} parent=1 // pred_check
      _
    $region27: #{tpu_custom_call.1} parent=1 // pred_check_branch
      %64 = sbr.rel (0) target = $region29
    $region28: #{tpu_custom_call.1} parent=1 // pred_region
      %65 = dma.done [#allocation6], 1408
    $region29: #{tpu_custom_call.1} parent=1 // pred_fallthru
      _
    // Predicated region
    $region30: #{tpu_custom_call.1} parent=1 // pred_check
      _
    $region31: #{tpu_custom_call.1} parent=1 // pred_check_branch
      %67 = sbr.rel (0) target = $region33
    $region32: #{tpu_custom_call.1} parent=1 // pred_region
      %68 = dma.done [#allocation9], 256
    $region33: #{tpu_custom_call.1} parent=1 // pred_fallthru
      _
    %v70 = vld [vmem:[#allocation2] sm:$0xff]
    %v71 = vpack.c.bf16 %v70, %v70
    %v72 = vld [vmem:[#allocation5] sm:$0xff]
    %v73 = vpack.c.bf16 %v72, %v72
    %v74 = vld [vmem:[#allocation7] sm:$0xf]
    %v75 = vld [vmem:[#allocation7 + $0x4] sm:$0xf]
    %v76 = vld [vmem:[#allocation7 + $0x8] sm:$0xf]
    %v77 = vld [vmem:[#allocation7 + $0xc] sm:$0xf]
    %v78 = vld [vmem:[#allocation7 + $0x10] sm:$0xf]
    %v79 = vld [vmem:[#allocation7 + $0x14] sm:$0xf]
    %v80 = vld [vmem:[#allocation7 + $0x18] sm:$0xf]
    %v81 = vld [vmem:[#allocation7 + $0x1c] sm:$0xf]
    %v82 = vld [vmem:[#allocation7 + $0x20] sm:$0xf]
    %v83 = vld [vmem:[#allocation7 + $0x24] sm:$0xf]
    %v84 = vld [vmem:[#allocation7 + $0x28] sm:$0xf]
    %v85 = vld [vmem:[#allocation7 + $0x2c] sm:$0xf]
    %v86 = vld [vmem:[#allocation7 + $0x30] sm:$0xf]
    %v87 = vld [vmem:[#allocation7 + $0x34] sm:$0xf]
    %v88 = vld [vmem:[#allocation7 + $0x38] sm:$0xf]
    %v89 = vld [vmem:[#allocation7 + $0x3c] sm:$0xf]
    %v90 = vld [vmem:[#allocation7 + $0x40] sm:$0xf]
    %v91 = vld [vmem:[#allocation7 + $0x44] sm:$0xf]
    %v92 = vld [vmem:[#allocation7 + $0x48] sm:$0xf]
    %v93 = vld [vmem:[#allocation7 + $0x4c] sm:$0xf]
    %v94 = vld [vmem:[#allocation7 + $0x50] sm:$0xf]
    %v95 = vld [vmem:[#allocation8] sm:$0x1]
    %v96 = vld [vmem:[#allocation8 + $0x1] sm:$0x1]
    %v97 = vld [vmem:[#allocation8 + $0x2] sm:$0x1]
    %v98 = vld [vmem:[#allocation8 + $0x3] sm:$0x1]
    %v99 = vld [vmem:[#allocation8 + $0x4] sm:$0x1]
    %v100 = vld [vmem:[#allocation8 + $0x5] sm:$0x1]
    %v101 = vld [vmem:[#allocation8 + $0x6] sm:$0x1]
    %v102 = vld [vmem:[#allocation8 + $0x7] sm:$0x1]
    %v103 = vld [vmem:[#allocation8 + $0x8] sm:$0x1]
    %v104 = vlaneseq
    %v105 = vshrl.u32 %v104, 7
    %v106 = vsub.s32 0, %v105
    %v107 = vrot.slane %v95, %v106
    %v112 = vunpack.c.l.b16 %v74
    %v113 = vunpack.c.l.b16 %v75
    %v114 = vunpack.c.l.b16 %v76
    %v115 = vunpack.c.l.b16 %v77
    %v116 = vpack.c.b16 %v113, %v112
    %v117 = vpack.c.b16 %v115, %v114
    %vm120 = vcmask 261120
    %v122 = vsel %vm120, %v71, 0
    %124 = vmatprep.subr.bf16.mxu0 0
    %125 = vmatpush1.bf16.msra.mxu0 0
    %126 = vmatprep.subr.bf16.mxu0 0
    %127 = vmatpush1.bf16.msra.mxu0 0
    %128 = vmatprep.subr.bf16.mxu0 0
    %129 = vmatpush1.bf16.msra.mxu0 0
    %130 = vmatprep.subr.bf16.mxu0 0
    %131 = vmatpush1.bf16.msra.mxu0 0
    %132 = vmatprep.subr.bf16.mxu0 0
    %133 = vmatpush1.bf16.msra.mxu0 0
    %134 = vmatprep.subr.bf16.mxu0 0
    %135 = vmatpush1.bf16.msra.mxu0 0
    %136 = vmatprep.subr.bf16.mxu0 0
    %137 = vmatpush1.bf16.msra.mxu0 %v117
    %138 = vmatprep.subr.bf16.mxu0 0
    %139 = vmatpush1.bf16.msra.mxu0 %v116
    %140 = vmatprep.subr.bf16.mxu0 0
    %141 = vmatpush2.bf16.msra.mxu0 0
    %142 = vmatprep.subr.bf16.mxu0 0
    %143 = vmatpush2.bf16.msra.mxu0 0
    %144 = vmatprep.subr.bf16.mxu0 0
    %145 = vmatpush2.bf16.msra.mxu0 0
    %146 = vmatprep.subr.bf16.mxu0 0
    %147 = vmatpush2.bf16.msra.mxu0 0
    %148 = vmatprep.subr.bf16.mxu0 0
    %149 = vmatpush2.bf16.msra.mxu0 0
    %150 = vmatprep.subr.bf16.mxu0 0
    %151 = vmatpush2.bf16.msra.mxu0 0
    %152 = vmatprep.subr.bf16.mxu0 0
    %153 = vmatpush2.bf16.msra.mxu0 0
    %154 = vmatprep.subr.bf16.mxu0 0
    %155 = vmatpush2.bf16.msra.mxu0 0
    %156 = vmatprep.mubr.bf16.mxu0 0
    %157 = vmatmul.mubr.bf16.gmra.mxu0 %v122
    %v158 = vpop.f32.mrf.mxu0
    %v159 = vadd.f32 %v107, %v158
    %v160 = vpop.f32.mrf.mxu0
    %v161 = vpop.f32.mrf.mxu0
    %v162 = vpop.f32.mrf.mxu0
    %163 = vdwg.mxu0
    %164 = vadd.xlane.f32.xlu0 %v159
    %v165 = vpop.xlane.xlu0 %164
    %v166 = vmul.f32 %v159, %v159
    %167 = vadd.xlane.f32.xlu0 %v166
    %v168 = vpop.xlane.xlu0 %167
    %v169 = vmul.f32 %v165, 0.0078125
    %v170 = vmul.f32 %v168, 0.0078125
    %v171 = vmul.f32 %v169, %v169
    %v172 = vsub.f32 %v170, %v171
    %v173 = vmax.f32 %v172, 0.0
    %v174 = vsub.f32 %v159, %v169
    %v175 = vadd.f32 %v173, 1e-05
    %v176 = vrsqrt.pop %v175
    %v177 = vmul.f32 %v174, %v176
    %v178 = vlaneseq
    %v179 = vshrl.u32 %v178, 7
    %v180 = vsub.s32 0, %v179
    %v181 = vrot.slane %v96, %v180
    %v182 = vmul.f32 %v177, %v181
    %v183 = vlaneseq
    %v184 = vshrl.u32 %v183, 7
    %v185 = vsub.s32 0, %v184
    %v186 = vrot.slane %v97, %v185
    %v187 = vadd.f32 %v182, %v186
    %v188 = vmax.f32 %v187, 0.0
    %v189 = vpack.c.bf16 %v188, %v188
    %v190 = vlaneseq
    %v191 = vshrl.u32 %v190, 7
    %v192 = vsub.s32 0, %v191
    %v193 = vrot.slane %v98, %v192
    %v210 = vunpack.c.l.b16 %v78
    %v211 = vunpack.c.l.b16 %v79
    %v212 = vunpack.c.l.b16 %v80
    %v213 = vunpack.c.l.b16 %v81
    %v214 = vunpack.c.l.b16 %v82
    %v215 = vunpack.c.l.b16 %v83
    %v216 = vunpack.c.l.b16 %v84
    %v217 = vunpack.c.l.b16 %v85
    %v218 = vunpack.c.l.b16 %v86
    %v219 = vunpack.c.l.b16 %v87
    %v220 = vunpack.c.l.b16 %v88
    %v221 = vunpack.c.l.b16 %v89
    %v222 = vunpack.c.l.b16 %v90
    %v223 = vunpack.c.l.b16 %v91
    %v224 = vunpack.c.l.b16 %v92
    %v225 = vunpack.c.l.b16 %v93
    %v226 = vpack.c.b16 %v211, %v210
    %v227 = vpack.c.b16 %v213, %v212
    %v228 = vpack.c.b16 %v215, %v214
    %v229 = vpack.c.b16 %v217, %v216
    %v230 = vpack.c.b16 %v219, %v218
    %v231 = vpack.c.b16 %v221, %v220
    %v232 = vpack.c.b16 %v223, %v222
    %v233 = vpack.c.b16 %v225, %v224
    %242 = vmatprep.subr.bf16.mxu0 0
    %243 = vmatpush1.bf16.msra.mxu0 %v233
    %244 = vmatprep.subr.bf16.mxu0 0
    %245 = vmatpush1.bf16.msra.mxu0 %v232
    %246 = vmatprep.subr.bf16.mxu0 0
    %247 = vmatpush1.bf16.msra.mxu0 %v231
    %248 = vmatprep.subr.bf16.mxu0 0
    %249 = vmatpush1.bf16.msra.mxu0 %v230
    %250 = vmatprep.subr.bf16.mxu0 0
    %251 = vmatpush1.bf16.msra.mxu0 %v229
    %252 = vmatprep.subr.bf16.mxu0 0
    %253 = vmatpush1.bf16.msra.mxu0 %v228
    %254 = vmatprep.subr.bf16.mxu0 0
    %255 = vmatpush1.bf16.msra.mxu0 %v227
    %256 = vmatprep.subr.bf16.mxu0 0
    %257 = vmatpush1.bf16.msra.mxu0 %v226
    %258 = vmatprep.subr.bf16.mxu0 0
    %259 = vmatpush2.bf16.msra.mxu0 0
    %260 = vmatprep.subr.bf16.mxu0 0
    %261 = vmatpush2.bf16.msra.mxu0 0
    %262 = vmatprep.subr.bf16.mxu0 0
    %263 = vmatpush2.bf16.msra.mxu0 0
    %264 = vmatprep.subr.bf16.mxu0 0
    %265 = vmatpush2.bf16.msra.mxu0 0
    %266 = vmatprep.subr.bf16.mxu0 0
    %267 = vmatpush2.bf16.msra.mxu0 0
    %268 = vmatprep.subr.bf16.mxu0 0
    %269 = vmatpush2.bf16.msra.mxu0 0
    %270 = vmatprep.subr.bf16.mxu0 0
    %271 = vmatpush2.bf16.msra.mxu0 0
    %272 = vmatprep.subr.bf16.mxu0 0
    %273 = vmatpush2.bf16.msra.mxu0 0
    %274 = vmatprep.mubr.bf16.mxu0 0
    %275 = vmatmul.mubr.bf16.gmra.mxu0 %v189
    %v276 = vpop.f32.mrf.mxu0
    %v277 = vadd.f32 %v193, %v276
    %v278 = vpop.f32.mrf.mxu0
    %v279 = vpop.f32.mrf.mxu0
    %v280 = vpop.f32.mrf.mxu0
    %281 = vdwg.mxu0
    %282 = vadd.xlane.f32.xlu0 %v277
    %v283 = vpop.xlane.xlu0 %282
    %v284 = vmul.f32 %v277, %v277
    %285 = vadd.xlane.f32.xlu0 %v284
    %v286 = vpop.xlane.xlu0 %285
    %v287 = vmul.f32 %v283, 0.0078125
    %v288 = vmul.f32 %v286, 0.0078125
    %v289 = vmul.f32 %v287, %v287
    %v290 = vsub.f32 %v288, %v289
    %v291 = vmax.f32 %v290, 0.0
    %v292 = vsub.f32 %v277, %v287
    %v293 = vadd.f32 %v291, 1e-05
    %v294 = vrsqrt.pop %v293
    %v295 = vmul.f32 %v292, %v294
    %v296 = vlaneseq
    %v297 = vshrl.u32 %v296, 7
    %v298 = vsub.s32 0, %v297
    %v299 = vrot.slane %v99, %v298
    %v300 = vmul.f32 %v295, %v299
    %v301 = vlaneseq
    %v302 = vshrl.u32 %v301, 7
    %v303 = vsub.s32 0, %v302
    %v304 = vrot.slane %v100, %v303
    %v305 = vadd.f32 %v300, %v304
    %v306 = vlaneseq
    %v307 = vshrl.u32 %v306, 7
    %v308 = vsub.s32 0, %v307
    %v309 = vrot.slane %v101, %v308
    %vm310 = vcmask 64512
    %v312 = vsel %vm310, %v73, 0
    %vm314 = vcmask 1043456
    %v316 = vsel %vm314, %v94, 0
    %318 = vmatprep.subr.bf16.mxu0 0
    %319 = vmatpush1.bf16.msra.mxu0 0
    %320 = vmatprep.subr.bf16.mxu0 0
    %321 = vmatpush1.bf16.msra.mxu0 0
    %322 = vmatprep.subr.bf16.mxu0 0
    %323 = vmatpush1.bf16.msra.mxu0 0
    %324 = vmatprep.subr.bf16.mxu0 0
    %325 = vmatpush1.bf16.msra.mxu0 0
    %326 = vmatprep.subr.bf16.mxu0 0
    %327 = vmatpush1.bf16.msra.mxu0 0
    %328 = vmatprep.subr.bf16.mxu0 0
    %329 = vmatpush1.bf16.msra.mxu0 0
    %330 = vmatprep.subr.bf16.mxu0 0
    %331 = vmatpush1.bf16.msra.mxu0 0
    %332 = vmatprep.subr.bf16.mxu0 0
    %333 = vmatpush1.bf16.msra.mxu0 %v316
    %334 = vmatprep.subr.bf16.mxu0 0
    %335 = vmatpush2.bf16.msra.mxu0 0
    %336 = vmatprep.subr.bf16.mxu0 0
    %337 = vmatpush2.bf16.msra.mxu0 0
    %338 = vmatprep.subr.bf16.mxu0 0
    %339 = vmatpush2.bf16.msra.mxu0 0
    %340 = vmatprep.subr.bf16.mxu0 0
    %341 = vmatpush2.bf16.msra.mxu0 0
    %342 = vmatprep.subr.bf16.mxu0 0
    %343 = vmatpush2.bf16.msra.mxu0 0
    %344 = vmatprep.subr.bf16.mxu0 0
    %345 = vmatpush2.bf16.msra.mxu0 0
    %346 = vmatprep.subr.bf16.mxu0 0
    %347 = vmatpush2.bf16.msra.mxu0 0
    %348 = vmatprep.subr.bf16.mxu0 0
    %349 = vmatpush2.bf16.msra.mxu0 0
    %350 = vmatprep.mubr.bf16.mxu0 0
    %351 = vmatmul.mubr.bf16.gmra.mxu0 %v312
    %v352 = vpop.f32.mrf.mxu0
    %v353 = vadd.f32 %v309, %v352
    %v354 = vpop.f32.mrf.mxu0
    %v355 = vpop.f32.mrf.mxu0
    %v356 = vpop.f32.mrf.mxu0
    %357 = vdwg.mxu0
    %v358 = vmax.f32 %v353, 0.0
    %v359 = vadd.f32 %v305, %v358
    %v360 = vmax.f32 %v359, 0.0
    %v361 = vlaneseq
    %v362 = vshrl.u32 %v361, 7
    %v363 = vsub.s32 0, %v362
    %v364 = vrot.slane %v102, %v363
    %v365 = vmul.f32 %v360, %v364
    %366 = vadd.xlane.f32.xlu0 %v365
    %v367 = vpop.xlane.xlu0 %366
    %369 = vset.pattern.permute.xlu0 0
    %370 = vperm.xlu0 %369, %v103
    %v371 = vpop.permute.xlu0 %370
    %v372 = vlaneseq
    %v373 = vshrl.u32 %v372, 7
    %v374 = vsub.s32 0, %v373
    %v375 = vrot.slane %v371, %v374
    %v377 = vadd.f32 %v367, %v375
    %379 = vset.pattern.permute.xlu0 0
    %380 = vperm.xlu0 %379, %v377
    %v381 = vpop.permute.xlu0 %380
    %v382 = vlaneseq
    %v383 = vand.u32 %v382, 127
    %v384 = vlaneseq
    %v385 = vshrl.u32 %v384, 7
    %v386 = vsub.s32 %v383, %v385
    %v387 = vrot.slane %v381, %v386
    %vm389 = vcmask 57344
    %390 = vst.msk [vmem:[#allocation10] sm:$0x1] %vm389, %v387
    // Predicated region
    $region34: #{tpu_custom_call.1} parent=1 // pred_check
      _
    $region35: #{tpu_custom_call.1} parent=1 // pred_check_branch
      %392 = sbr.rel (0) target = $region37
    $region36: #{tpu_custom_call.1} parent=1 // pred_region
      %s394 = ssub.s32 16, 16
      %395 = vsyncadd [#allocation4], %s394
      %s397 = sshll.u32 [#allocation10], 4
      %s398 = int_to_ptr.vmem [resolvable:$true] %s397
      %400 = dma.vmem_to_hbm [thread:$0]  %s398, 16, %s4, [#allocation4]
    $region37: #{tpu_custom_call.1} parent=1 // pred_fallthru
      _
    // Predicated region
    $region38: #{tpu_custom_call.1} parent=1 // pred_check
      _
    $region39: #{tpu_custom_call.1} parent=1 // pred_check_branch
      %402 = sbr.rel (0) target = $region41
    $region40: #{tpu_custom_call.1} parent=1 // pred_region
      %403 = dma.done [#allocation4], 16
    $region41: #{tpu_custom_call.1} parent=1 // pred_fallthru
      _
    %404 = vsyncpa [#allocation3], 1
    %405 = vsyncpa [#allocation6], 1
    %406 = vsyncpa [#allocation9], 1
    %407 = vsyncpa [#allocation4], 1

</llo_original>
